<compile_context>
chip_gen: v6e
topology: v6e:2x2x1
jax: 0.10.0
libtpu: 0.0.40
codegen_flags: <defaults>
</compile_context>

<pallas_src>
import jax
import jax.numpy as jnp
from jax.experimental import pallas as pl
from jax.experimental.pallas import tpu as pltpu


def _round_up(n, m):
    return ((n + m - 1) // m) * m


def _cdiv(a, b):
    return (a + b - 1) // b


def _choose_tiles(n):
    """Pick (batch_tile, chunk_width).

    The batch tile is large (up to 4096 lanes) to amortize the ~0.35us
    per-grid-step overhead, but targets ~cdiv(n,2) so there are >=2 grid steps
    for v7x's two TensorCores.  The inner chunk width keeps per-chunk live
    activations small enough to stay in vregs.
    """
    tb = min(4096, _round_up(_cdiv(max(n, 1), 2), 128))
    tb = max(tb, 128)
    if tb > 1024:
        tb = _round_up(tb, 512)          # keep the 512-lane inner chunk exact
    if tb % 512 == 0:
        cw = 512
    elif tb % 256 == 0:
        cw = 256
    else:
        cw = 128
    return tb, cw


def _dense_vpu(w_ref, b_ref, h, cw):
    """y = W @ h + b as broadcasted multiply-adds on the VPU.

    w_ref: (in_f, out_f, cw) VMEM ref, lane-replicated columns of W (PyTorch
           (out,in) layout, transposed then broadcast along lanes).
    b_ref: (out_f, cw) lane-replicated bias.
    h:     (in_f, cw) f32 activations, batch on the lane axis.
    Returns (out_f, cw) f32.
    """
    in_f = w_ref.shape[0]
    out_f = w_ref.shape[1]
    acc0 = b_ref[...]
    acc1 = jnp.zeros_like(acc0) if in_f >= 8 else None
    for k in range(in_f):                         # static unroll, in_f <= 20
        hk = jnp.broadcast_to(h[k:k + 1, :], (out_f, cw))   # sublane splat (XLU)
        term = w_ref[k] * hk                                 # w slab: plain vld
        if acc1 is not None and (k % 2 == 1):
            acc1 = acc1 + term
        else:
            acc0 = acc0 + term
    return acc0 if acc1 is None else acc0 + acc1


def _final_row(w_ref, b_ref, h):
    """Final layer with a single output: elementwise multiply + sublane reduce.

    w_ref: (in_f, cw) with row k == W[0, k] (lane-replicated).
    b_ref: (1, cw).
    h:     (in_f, cw) f32.
    """
    prod = w_ref[...] * h
    return jnp.sum(prod, axis=0, keepdims=True) + b_ref[...]


def _make_kernel(cw, num_chunks):
    def mlp_kernel(x_ref,
                   w1, b1, w2, b2, w3, b3, w4, b4, w5, b5,
                   o_ref):
        """Whole MLP for one batch tile.  x_ref: (2, TB), o_ref: (1, TB)."""
        @pl.loop(0, num_chunks)
        def _chunk(c):
            col = pl.multiple_of(c * cw, cw)
            h = x_ref[:, pl.ds(col, cw)].astype(jnp.float32)     # (2, cw)
            h = jnp.tanh(_dense_vpu(w1, b1, h, cw))              # (20, cw)
            h = jnp.tanh(_dense_vpu(w2, b2, h, cw))              # (10, cw)
            h = jnp.tanh(_dense_vpu(w3, b3, h, cw))              # (5, cw)
            h = jnp.tanh(_dense_vpu(w4, b4, h, cw))              # (5, cw)
            y = _final_row(w5, b5, h)                            # (1, cw)
            o_ref[:, pl.ds(col, cw)] = y.astype(o_ref.dtype)

    return mlp_kernel


def neural_network_forward(x, params):
    """x: (N, 2) as in PyTorch.  params: list of (W, b) with W (out, in)
    (PyTorch nn.Linear layout) and b (out, 1).  Returns (N, 1) f32 logits."""
    n, in_f = x.shape
    n_layers = len(params)

    tb, cw = _choose_tiles(n)
    num_chunks = tb // cw
    padded_n = _round_up(max(n, 1), tb)

    # Lane-dense layout: batch on the 128-wide lane axis; zero-pad the tail.
    # TODO(synk): have the producer emit feature-major (2, N) to drop this
    # wrapper transpose (extra HBM read+write of x).
    xt = jnp.zeros((in_f, padded_n), jnp.float32).at[:, :n].set(
        x.T.astype(jnp.float32))

    flat_params = []
    in_specs = [pl.BlockSpec((in_f, tb), lambda i: (0, i))]
    for li, (w, b) in enumerate(params):
        out_f, fan_in = w.shape
        wf = w.astype(jnp.float32)
        bf = b.astype(jnp.float32)
        if li < n_layers - 1:
            # (in_f, out_f, cw): slab[k] is W[:, k] replicated along lanes.
            w_slab = jnp.broadcast_to(jnp.transpose(wf)[:, :, None],
                                      (fan_in, out_f, cw))
            b_slab = jnp.broadcast_to(bf.reshape(out_f, 1), (out_f, cw))
        else:
            # single-output layer: row k of the slab == W[0, k].
            w_slab = jnp.broadcast_to(jnp.transpose(wf), (fan_in, cw))
            b_slab = jnp.broadcast_to(bf.reshape(1, 1), (1, cw))
        flat_params += [w_slab, b_slab]
        # Full-array blocks with constant index_map -> fetched once, stay
        # VMEM-resident across all grid steps.
        in_specs.append(pl.BlockSpec(w_slab.shape,
                                     lambda i, nd=w_slab.ndim: (0,) * nd))
        in_specs.append(pl.BlockSpec(b_slab.shape,
                                     lambda i, nd=b_slab.ndim: (0,) * nd))

    out = pl.pallas_call(
        _make_kernel(cw, num_chunks),
        out_shape=jax.ShapeDtypeStruct((1, padded_n), jnp.float32),
        grid_spec=pltpu.PrefetchScalarGridSpec(
            num_scalar_prefetch=0,
            grid=(padded_n // tb,),
            in_specs=in_specs,
            out_specs=pl.BlockSpec((1, tb), lambda i: (0, i)),
        ),
        compiler_params=pltpu.CompilerParams(
            dimension_semantics=("parallel",)),
    )(xt, *flat_params)

    return out[:, :n].T  # (N, 1)


def init_params(key):
    """PyTorch-style init.  Weights in PyTorch (out, in) layout, biases (out, 1)."""
    layer_dims = [(2, 20), (20, 10), (10, 5), (5, 5), (5, 1)]
    params = []
    for fan_in, fan_out in layer_dims:
        key, kw, kb = jax.random.split(key, 3)
        bound = 1.0 / (fan_in ** 0.5)
        w = jax.random.uniform(kw, (fan_out, fan_in), jnp.float32,
                               minval=-bound, maxval=bound)
        b = jax.random.uniform(kb, (fan_out, 1), jnp.float32,
                               minval=-bound, maxval=bound)
        params.append((w, b))
    return params


def reference_forward(x, params):
    h = x
    for i, (w, b) in enumerate(params):
        h = h @ w.T + b[:, 0]
        if i < len(params) - 1:
            h = jnp.tanh(h)
    return h


if __name__ == "__main__":
    key = jax.random.PRNGKey(0)
    key, kx1, kx2 = jax.random.split(key, 3)
    params = init_params(key)

    # Small example consistent with the module: batch=8, in_features=2.
    batch = 8
    x = jax.random.normal(kx1, (batch, 2), jnp.float32)
    out = jax.block_until_ready(neural_network_forward(x, params))
    ref = reference_forward(x, params)
    assert out.shape == (batch, 1), out.shape
    assert jnp.allclose(out, ref, atol=1e-5, rtol=1e-5), (out, ref)

    # Secondary check exercising the multi-step grid + inner chunk loop.
    batch2 = 3000
    x2 = jax.random.normal(kx2, (batch2, 2), jnp.float32)
    out2 = jax.block_until_ready(neural_network_forward(x2, params))
    ref2 = reference_forward(x2, params)
    assert out2.shape == (batch2, 1), out2.shape
    assert jnp.allclose(out2, ref2, atol=2e-5, rtol=1e-4)

    print("KERNEL_OK")
</pallas_src>

<mosaic_0001>
module attributes {stable_mosaic.version = 11 : i64} {
  func.func @mlp_kernel(%arg0: i32, %arg1: memref<2x128xf32, #tpu.memory_space<vmem>>, %arg2: memref<2x20x128xf32, #tpu.memory_space<vmem>>, %arg3: memref<20x128xf32, #tpu.memory_space<vmem>>, %arg4: memref<20x10x128xf32, #tpu.memory_space<vmem>>, %arg5: memref<10x128xf32, #tpu.memory_space<vmem>>, %arg6: memref<10x5x128xf32, #tpu.memory_space<vmem>>, %arg7: memref<5x128xf32, #tpu.memory_space<vmem>>, %arg8: memref<5x5x128xf32, #tpu.memory_space<vmem>>, %arg9: memref<5x128xf32, #tpu.memory_space<vmem>>, %arg10: memref<5x128xf32, #tpu.memory_space<vmem>>, %arg11: memref<1x128xf32, #tpu.memory_space<vmem>>, %arg12: memref<1x128xf32, #tpu.memory_space<vmem>>) attributes {dimension_semantics = [#tpu.dimension_semantics<parallel>], iteration_bounds = array<i64: 1>, scalar_prefetch = 0 : i64, scratch_operands = 0 : i64, tpu.core_type = #tpu.core_type<tc>, window_params = [{transform_indices = @transform_0, window_bounds = array<i64: 2, 128>}, {pipeline_mode = #tpu.pipeline_mode<synchronous>, transform_indices = @transform_1, window_bounds = array<i64: 2, 20, 128>}, {pipeline_mode = #tpu.pipeline_mode<synchronous>, transform_indices = @transform_2, window_bounds = array<i64: 20, 128>}, {pipeline_mode = #tpu.pipeline_mode<synchronous>, transform_indices = @transform_3, window_bounds = array<i64: 20, 10, 128>}, {pipeline_mode = #tpu.pipeline_mode<synchronous>, transform_indices = @transform_4, window_bounds = array<i64: 10, 128>}, {pipeline_mode = #tpu.pipeline_mode<synchronous>, transform_indices = @transform_5, window_bounds = array<i64: 10, 5, 128>}, {pipeline_mode = #tpu.pipeline_mode<synchronous>, transform_indices = @transform_6, window_bounds = array<i64: 5, 128>}, {pipeline_mode = #tpu.pipeline_mode<synchronous>, transform_indices = @transform_7, window_bounds = array<i64: 5, 5, 128>}, {pipeline_mode = #tpu.pipeline_mode<synchronous>, transform_indices = @transform_8, window_bounds = array<i64: 5, 128>}, {pipeline_mode = #tpu.pipeline_mode<synchronous>, transform_indices = @transform_9, window_bounds = array<i64: 5, 128>}, {pipeline_mode = #tpu.pipeline_mode<synchronous>, transform_indices = @transform_10, window_bounds = array<i64: 1, 128>}, {transform_indices = @transform_11, window_bounds = array<i64: 1, 128>}]} {
    %c0_i32 = arith.constant 0 : i32
    %c1_i32 = arith.constant 1 : i32
    %0 = arith.muli %c0_i32, %c1_i32 : i32
    %c0_i32_0 = arith.constant 0 : i32
    %1 = arith.addi %c0_i32_0, %0 : i32
    %c128_i32 = arith.constant 128 : i32
    %2 = arith.muli %1, %c128_i32 : i32
    %3 = tpu.assume_multiple %2, 128 : i32
    %c0 = arith.constant 0 : index
    %4 = arith.index_cast %3 : i32 to index
    %5 = vector.load %arg1[%c0, %4] : memref<2x128xf32, #tpu.memory_space<vmem>>, vector<2x128xf32>
    %c0_1 = arith.constant 0 : index
    %c0_2 = arith.constant 0 : index
    %6 = vector.load %arg3[%c0_1, %c0_2] : memref<20x128xf32, #tpu.memory_space<vmem>>, vector<20x128xf32>
    %7 = vector.extract_strided_slice %5 {offsets = [0, 0], sizes = [1, 128], strides = [1, 1]} : vector<2x128xf32> to vector<1x128xf32>
    %8 = vector.shape_cast %7 : vector<1x128xf32> to vector<1x128xf32>
    %9 = vector.broadcast %8 : vector<1x128xf32> to vector<20x128xf32>
    %c0_3 = arith.constant 0 : index
    %c0_4 = arith.constant 0 : index
    %c0_5 = arith.constant 0 : index
    %10 = vector.load %arg2[%c0_3, %c0_4, %c0_5] : memref<2x20x128xf32, #tpu.memory_space<vmem>>, vector<1x20x128xf32>
    %11 = vector.shape_cast %10 : vector<1x20x128xf32> to vector<20x128xf32>
    %12 = arith.mulf %11, %9 : vector<20x128xf32>
    %13 = arith.addf %6, %12 : vector<20x128xf32>
    %14 = vector.extract_strided_slice %5 {offsets = [1, 0], sizes = [1, 128], strides = [1, 1]} : vector<2x128xf32> to vector<1x128xf32>
    %15 = vector.shape_cast %14 : vector<1x128xf32> to vector<1x128xf32>
    %16 = vector.broadcast %15 : vector<1x128xf32> to vector<20x128xf32>
    %c1 = arith.constant 1 : index
    %c0_6 = arith.constant 0 : index
    %c0_7 = arith.constant 0 : index
    %17 = vector.load %arg2[%c1, %c0_6, %c0_7] : memref<2x20x128xf32, #tpu.memory_space<vmem>>, vector<1x20x128xf32>
    %18 = vector.shape_cast %17 : vector<1x20x128xf32> to vector<20x128xf32>
    %19 = arith.mulf %18, %16 : vector<20x128xf32>
    %20 = arith.addf %13, %19 : vector<20x128xf32>
    %21 = math.tanh %20 : vector<20x128xf32>
    %c0_8 = arith.constant 0 : index
    %c0_9 = arith.constant 0 : index
    %22 = vector.load %arg5[%c0_8, %c0_9] : memref<10x128xf32, #tpu.memory_space<vmem>>, vector<10x128xf32>
    %cst = arith.constant 0.000000e+00 : f32
    %23 = vector.broadcast %cst : f32 to vector<10x128xf32>
    %24 = vector.extract_strided_slice %21 {offsets = [0, 0], sizes = [1, 128], strides = [1, 1]} : vector<20x128xf32> to vector<1x128xf32>
    %25 = vector.shape_cast %24 : vector<1x128xf32> to vector<1x128xf32>
    %26 = vector.broadcast %25 : vector<1x128xf32> to vector<10x128xf32>
    %c0_10 = arith.constant 0 : index
    %c0_11 = arith.constant 0 : index
    %c0_12 = arith.constant 0 : index
    %27 = vector.load %arg4[%c0_10, %c0_11, %c0_12] : memref<20x10x128xf32, #tpu.memory_space<vmem>>, vector<1x10x128xf32>
    %28 = vector.shape_cast %27 : vector<1x10x128xf32> to vector<10x128xf32>
    %29 = arith.mulf %28, %26 : vector<10x128xf32>
    %30 = arith.addf %22, %29 : vector<10x128xf32>
    %31 = vector.extract_strided_slice %21 {offsets = [1, 0], sizes = [1, 128], strides = [1, 1]} : vector<20x128xf32> to vector<1x128xf32>
    %32 = vector.shape_cast %31 : vector<1x128xf32> to vector<1x128xf32>
    %33 = vector.broadcast %32 : vector<1x128xf32> to vector<10x128xf32>
    %c1_13 = arith.constant 1 : index
    %c0_14 = arith.constant 0 : index
    %c0_15 = arith.constant 0 : index
    %34 = vector.load %arg4[%c1_13, %c0_14, %c0_15] : memref<20x10x128xf32, #tpu.memory_space<vmem>>, vector<1x10x128xf32>
    %35 = vector.shape_cast %34 : vector<1x10x128xf32> to vector<10x128xf32>
    %36 = arith.mulf %35, %33 : vector<10x128xf32>
    %37 = arith.addf %23, %36 : vector<10x128xf32>
    %38 = vector.extract_strided_slice %21 {offsets = [2, 0], sizes = [1, 128], strides = [1, 1]} : vector<20x128xf32> to vector<1x128xf32>
    %39 = vector.shape_cast %38 : vector<1x128xf32> to vector<1x128xf32>
    %40 = vector.broadcast %39 : vector<1x128xf32> to vector<10x128xf32>
    %c2 = arith.constant 2 : index
    %c0_16 = arith.constant 0 : index
    %c0_17 = arith.constant 0 : index
    %41 = vector.load %arg4[%c2, %c0_16, %c0_17] : memref<20x10x128xf32, #tpu.memory_space<vmem>>, vector<1x10x128xf32>
    %42 = vector.shape_cast %41 : vector<1x10x128xf32> to vector<10x128xf32>
    %43 = arith.mulf %42, %40 : vector<10x128xf32>
    %44 = arith.addf %30, %43 : vector<10x128xf32>
    %45 = vector.extract_strided_slice %21 {offsets = [3, 0], sizes = [1, 128], strides = [1, 1]} : vector<20x128xf32> to vector<1x128xf32>
    %46 = vector.shape_cast %45 : vector<1x128xf32> to vector<1x128xf32>
    %47 = vector.broadcast %46 : vector<1x128xf32> to vector<10x128xf32>
    %c3 = arith.constant 3 : index
    %c0_18 = arith.constant 0 : index
    %c0_19 = arith.constant 0 : index
    %48 = vector.load %arg4[%c3, %c0_18, %c0_19] : memref<20x10x128xf32, #tpu.memory_space<vmem>>, vector<1x10x128xf32>
    %49 = vector.shape_cast %48 : vector<1x10x128xf32> to vector<10x128xf32>
    %50 = arith.mulf %49, %47 : vector<10x128xf32>
    %51 = arith.addf %37, %50 : vector<10x128xf32>
    %52 = vector.extract_strided_slice %21 {offsets = [4, 0], sizes = [1, 128], strides = [1, 1]} : vector<20x128xf32> to vector<1x128xf32>
    %53 = vector.shape_cast %52 : vector<1x128xf32> to vector<1x128xf32>
    %54 = vector.broadcast %53 : vector<1x128xf32> to vector<10x128xf32>
    %c4 = arith.constant 4 : index
    %c0_20 = arith.constant 0 : index
    %c0_21 = arith.constant 0 : index
    %55 = vector.load %arg4[%c4, %c0_20, %c0_21] : memref<20x10x128xf32, #tpu.memory_space<vmem>>, vector<1x10x128xf32>
    %56 = vector.shape_cast %55 : vector<1x10x128xf32> to vector<10x128xf32>
    %57 = arith.mulf %56, %54 : vector<10x128xf32>
    %58 = arith.addf %44, %57 : vector<10x128xf32>
    %59 = vector.extract_strided_slice %21 {offsets = [5, 0], sizes = [1, 128], strides = [1, 1]} : vector<20x128xf32> to vector<1x128xf32>
    %60 = vector.shape_cast %59 : vector<1x128xf32> to vector<1x128xf32>
    %61 = vector.broadcast %60 : vector<1x128xf32> to vector<10x128xf32>
    %c5 = arith.constant 5 : index
    %c0_22 = arith.constant 0 : index
    %c0_23 = arith.constant 0 : index
    %62 = vector.load %arg4[%c5, %c0_22, %c0_23] : memref<20x10x128xf32, #tpu.memory_space<vmem>>, vector<1x10x128xf32>
    %63 = vector.shape_cast %62 : vector<1x10x128xf32> to vector<10x128xf32>
    %64 = arith.mulf %63, %61 : vector<10x128xf32>
    %65 = arith.addf %51, %64 : vector<10x128xf32>
    %66 = vector.extract_strided_slice %21 {offsets = [6, 0], sizes = [1, 128], strides = [1, 1]} : vector<20x128xf32> to vector<1x128xf32>
    %67 = vector.shape_cast %66 : vector<1x128xf32> to vector<1x128xf32>
    %68 = vector.broadcast %67 : vector<1x128xf32> to vector<10x128xf32>
    %c6 = arith.constant 6 : index
    %c0_24 = arith.constant 0 : index
    %c0_25 = arith.constant 0 : index
    %69 = vector.load %arg4[%c6, %c0_24, %c0_25] : memref<20x10x128xf32, #tpu.memory_space<vmem>>, vector<1x10x128xf32>
    %70 = vector.shape_cast %69 : vector<1x10x128xf32> to vector<10x128xf32>
    %71 = arith.mulf %70, %68 : vector<10x128xf32>
    %72 = arith.addf %58, %71 : vector<10x128xf32>
    %73 = vector.extract_strided_slice %21 {offsets = [7, 0], sizes = [1, 128], strides = [1, 1]} : vector<20x128xf32> to vector<1x128xf32>
    %74 = vector.shape_cast %73 : vector<1x128xf32> to vector<1x128xf32>
    %75 = vector.broadcast %74 : vector<1x128xf32> to vector<10x128xf32>
    %c7 = arith.constant 7 : index
    %c0_26 = arith.constant 0 : index
    %c0_27 = arith.constant 0 : index
    %76 = vector.load %arg4[%c7, %c0_26, %c0_27] : memref<20x10x128xf32, #tpu.memory_space<vmem>>, vector<1x10x128xf32>
    %77 = vector.shape_cast %76 : vector<1x10x128xf32> to vector<10x128xf32>
    %78 = arith.mulf %77, %75 : vector<10x128xf32>
    %79 = arith.addf %65, %78 : vector<10x128xf32>
    %80 = vector.extract_strided_slice %21 {offsets = [8, 0], sizes = [1, 128], strides = [1, 1]} : vector<20x128xf32> to vector<1x128xf32>
    %81 = vector.shape_cast %80 : vector<1x128xf32> to vector<1x128xf32>
    %82 = vector.broadcast %81 : vector<1x128xf32> to vector<10x128xf32>
    %c8 = arith.constant 8 : index
    %c0_28 = arith.constant 0 : index
    %c0_29 = arith.constant 0 : index
    %83 = vector.load %arg4[%c8, %c0_28, %c0_29] : memref<20x10x128xf32, #tpu.memory_space<vmem>>, vector<1x10x128xf32>
    %84 = vector.shape_cast %83 : vector<1x10x128xf32> to vector<10x128xf32>
    %85 = arith.mulf %84, %82 : vector<10x128xf32>
    %86 = arith.addf %72, %85 : vector<10x128xf32>
    %87 = vector.extract_strided_slice %21 {offsets = [9, 0], sizes = [1, 128], strides = [1, 1]} : vector<20x128xf32> to vector<1x128xf32>
    %88 = vector.shape_cast %87 : vector<1x128xf32> to vector<1x128xf32>
    %89 = vector.broadcast %88 : vector<1x128xf32> to vector<10x128xf32>
    %c9 = arith.constant 9 : index
    %c0_30 = arith.constant 0 : index
    %c0_31 = arith.constant 0 : index
    %90 = vector.load %arg4[%c9, %c0_30, %c0_31] : memref<20x10x128xf32, #tpu.memory_space<vmem>>, vector<1x10x128xf32>
    %91 = vector.shape_cast %90 : vector<1x10x128xf32> to vector<10x128xf32>
    %92 = arith.mulf %91, %89 : vector<10x128xf32>
    %93 = arith.addf %79, %92 : vector<10x128xf32>
    %94 = vector.extract_strided_slice %21 {offsets = [10, 0], sizes = [1, 128], strides = [1, 1]} : vector<20x128xf32> to vector<1x128xf32>
    %95 = vector.shape_cast %94 : vector<1x128xf32> to vector<1x128xf32>
    %96 = vector.broadcast %95 : vector<1x128xf32> to vector<10x128xf32>
    %c10 = arith.constant 10 : index
    %c0_32 = arith.constant 0 : index
    %c0_33 = arith.constant 0 : index
    %97 = vector.load %arg4[%c10, %c0_32, %c0_33] : memref<20x10x128xf32, #tpu.memory_space<vmem>>, vector<1x10x128xf32>
    %98 = vector.shape_cast %97 : vector<1x10x128xf32> to vector<10x128xf32>
    %99 = arith.mulf %98, %96 : vector<10x128xf32>
    %100 = arith.addf %86, %99 : vector<10x128xf32>
    %101 = vector.extract_strided_slice %21 {offsets = [11, 0], sizes = [1, 128], strides = [1, 1]} : vector<20x128xf32> to vector<1x128xf32>
    %102 = vector.shape_cast %101 : vector<1x128xf32> to vector<1x128xf32>
    %103 = vector.broadcast %102 : vector<1x128xf32> to vector<10x128xf32>
    %c11 = arith.constant 11 : index
    %c0_34 = arith.constant 0 : index
    %c0_35 = arith.constant 0 : index
    %104 = vector.load %arg4[%c11, %c0_34, %c0_35] : memref<20x10x128xf32, #tpu.memory_space<vmem>>, vector<1x10x128xf32>
    %105 = vector.shape_cast %104 : vector<1x10x128xf32> to vector<10x128xf32>
    %106 = arith.mulf %105, %103 : vector<10x128xf32>
    %107 = arith.addf %93, %106 : vector<10x128xf32>
    %108 = vector.extract_strided_slice %21 {offsets = [12, 0], sizes = [1, 128], strides = [1, 1]} : vector<20x128xf32> to vector<1x128xf32>
    %109 = vector.shape_cast %108 : vector<1x128xf32> to vector<1x128xf32>
    %110 = vector.broadcast %109 : vector<1x128xf32> to vector<10x128xf32>
    %c12 = arith.constant 12 : index
    %c0_36 = arith.constant 0 : index
    %c0_37 = arith.constant 0 : index
    %111 = vector.load %arg4[%c12, %c0_36, %c0_37] : memref<20x10x128xf32, #tpu.memory_space<vmem>>, vector<1x10x128xf32>
    %112 = vector.shape_cast %111 : vector<1x10x128xf32> to vector<10x128xf32>
    %113 = arith.mulf %112, %110 : vector<10x128xf32>
    %114 = arith.addf %100, %113 : vector<10x128xf32>
    %115 = vector.extract_strided_slice %21 {offsets = [13, 0], sizes = [1, 128], strides = [1, 1]} : vector<20x128xf32> to vector<1x128xf32>
    %116 = vector.shape_cast %115 : vector<1x128xf32> to vector<1x128xf32>
    %117 = vector.broadcast %116 : vector<1x128xf32> to vector<10x128xf32>
    %c13 = arith.constant 13 : index
    %c0_38 = arith.constant 0 : index
    %c0_39 = arith.constant 0 : index
    %118 = vector.load %arg4[%c13, %c0_38, %c0_39] : memref<20x10x128xf32, #tpu.memory_space<vmem>>, vector<1x10x128xf32>
    %119 = vector.shape_cast %118 : vector<1x10x128xf32> to vector<10x128xf32>
    %120 = arith.mulf %119, %117 : vector<10x128xf32>
    %121 = arith.addf %107, %120 : vector<10x128xf32>
    %122 = vector.extract_strided_slice %21 {offsets = [14, 0], sizes = [1, 128], strides = [1, 1]} : vector<20x128xf32> to vector<1x128xf32>
    %123 = vector.shape_cast %122 : vector<1x128xf32> to vector<1x128xf32>
    %124 = vector.broadcast %123 : vector<1x128xf32> to vector<10x128xf32>
    %c14 = arith.constant 14 : index
    %c0_40 = arith.constant 0 : index
    %c0_41 = arith.constant 0 : index
    %125 = vector.load %arg4[%c14, %c0_40, %c0_41] : memref<20x10x128xf32, #tpu.memory_space<vmem>>, vector<1x10x128xf32>
    %126 = vector.shape_cast %125 : vector<1x10x128xf32> to vector<10x128xf32>
    %127 = arith.mulf %126, %124 : vector<10x128xf32>
    %128 = arith.addf %114, %127 : vector<10x128xf32>
    %129 = vector.extract_strided_slice %21 {offsets = [15, 0], sizes = [1, 128], strides = [1, 1]} : vector<20x128xf32> to vector<1x128xf32>
    %130 = vector.shape_cast %129 : vector<1x128xf32> to vector<1x128xf32>
    %131 = vector.broadcast %130 : vector<1x128xf32> to vector<10x128xf32>
    %c15 = arith.constant 15 : index
    %c0_42 = arith.constant 0 : index
    %c0_43 = arith.constant 0 : index
    %132 = vector.load %arg4[%c15, %c0_42, %c0_43] : memref<20x10x128xf32, #tpu.memory_space<vmem>>, vector<1x10x128xf32>
    %133 = vector.shape_cast %132 : vector<1x10x128xf32> to vector<10x128xf32>
    %134 = arith.mulf %133, %131 : vector<10x128xf32>
    %135 = arith.addf %121, %134 : vector<10x128xf32>
    %136 = vector.extract_strided_slice %21 {offsets = [16, 0], sizes = [1, 128], strides = [1, 1]} : vector<20x128xf32> to vector<1x128xf32>
    %137 = vector.shape_cast %136 : vector<1x128xf32> to vector<1x128xf32>
    %138 = vector.broadcast %137 : vector<1x128xf32> to vector<10x128xf32>
    %c16 = arith.constant 16 : index
    %c0_44 = arith.constant 0 : index
    %c0_45 = arith.constant 0 : index
    %139 = vector.load %arg4[%c16, %c0_44, %c0_45] : memref<20x10x128xf32, #tpu.memory_space<vmem>>, vector<1x10x128xf32>
    %140 = vector.shape_cast %139 : vector<1x10x128xf32> to vector<10x128xf32>
    %141 = arith.mulf %140, %138 : vector<10x128xf32>
    %142 = arith.addf %128, %141 : vector<10x128xf32>
    %143 = vector.extract_strided_slice %21 {offsets = [17, 0], sizes = [1, 128], strides = [1, 1]} : vector<20x128xf32> to vector<1x128xf32>
    %144 = vector.shape_cast %143 : vector<1x128xf32> to vector<1x128xf32>
    %145 = vector.broadcast %144 : vector<1x128xf32> to vector<10x128xf32>
    %c17 = arith.constant 17 : index
    %c0_46 = arith.constant 0 : index
    %c0_47 = arith.constant 0 : index
    %146 = vector.load %arg4[%c17, %c0_46, %c0_47] : memref<20x10x128xf32, #tpu.memory_space<vmem>>, vector<1x10x128xf32>
    %147 = vector.shape_cast %146 : vector<1x10x128xf32> to vector<10x128xf32>
    %148 = arith.mulf %147, %145 : vector<10x128xf32>
    %149 = arith.addf %135, %148 : vector<10x128xf32>
    %150 = vector.extract_strided_slice %21 {offsets = [18, 0], sizes = [1, 128], strides = [1, 1]} : vector<20x128xf32> to vector<1x128xf32>
    %151 = vector.shape_cast %150 : vector<1x128xf32> to vector<1x128xf32>
    %152 = vector.broadcast %151 : vector<1x128xf32> to vector<10x128xf32>
    %c18 = arith.constant 18 : index
    %c0_48 = arith.constant 0 : index
    %c0_49 = arith.constant 0 : index
    %153 = vector.load %arg4[%c18, %c0_48, %c0_49] : memref<20x10x128xf32, #tpu.memory_space<vmem>>, vector<1x10x128xf32>
    %154 = vector.shape_cast %153 : vector<1x10x128xf32> to vector<10x128xf32>
    %155 = arith.mulf %154, %152 : vector<10x128xf32>
    %156 = arith.addf %142, %155 : vector<10x128xf32>
    %157 = vector.extract_strided_slice %21 {offsets = [19, 0], sizes = [1, 128], strides = [1, 1]} : vector<20x128xf32> to vector<1x128xf32>
    %158 = vector.shape_cast %157 : vector<1x128xf32> to vector<1x128xf32>
    %159 = vector.broadcast %158 : vector<1x128xf32> to vector<10x128xf32>
    %c19 = arith.constant 19 : index
    %c0_50 = arith.constant 0 : index
    %c0_51 = arith.constant 0 : index
    %160 = vector.load %arg4[%c19, %c0_50, %c0_51] : memref<20x10x128xf32, #tpu.memory_space<vmem>>, vector<1x10x128xf32>
    %161 = vector.shape_cast %160 : vector<1x10x128xf32> to vector<10x128xf32>
    %162 = arith.mulf %161, %159 : vector<10x128xf32>
    %163 = arith.addf %149, %162 : vector<10x128xf32>
    %164 = arith.addf %156, %163 : vector<10x128xf32>
    %165 = math.tanh %164 : vector<10x128xf32>
    %c0_52 = arith.constant 0 : index
    %c0_53 = arith.constant 0 : index
    %166 = vector.load %arg7[%c0_52, %c0_53] : memref<5x128xf32, #tpu.memory_space<vmem>>, vector<5x128xf32>
    %cst_54 = arith.constant 0.000000e+00 : f32
    %167 = vector.broadcast %cst_54 : f32 to vector<5x128xf32>
    %168 = vector.extract_strided_slice %165 {offsets = [0, 0], sizes = [1, 128], strides = [1, 1]} : vector<10x128xf32> to vector<1x128xf32>
    %169 = vector.shape_cast %168 : vector<1x128xf32> to vector<1x128xf32>
    %170 = vector.broadcast %169 : vector<1x128xf32> to vector<5x128xf32>
    %c0_55 = arith.constant 0 : index
    %c0_56 = arith.constant 0 : index
    %c0_57 = arith.constant 0 : index
    %171 = vector.load %arg6[%c0_55, %c0_56, %c0_57] : memref<10x5x128xf32, #tpu.memory_space<vmem>>, vector<1x5x128xf32>
    %172 = vector.shape_cast %171 : vector<1x5x128xf32> to vector<5x128xf32>
    %173 = arith.mulf %172, %170 : vector<5x128xf32>
    %174 = arith.addf %166, %173 : vector<5x128xf32>
    %175 = vector.extract_strided_slice %165 {offsets = [1, 0], sizes = [1, 128], strides = [1, 1]} : vector<10x128xf32> to vector<1x128xf32>
    %176 = vector.shape_cast %175 : vector<1x128xf32> to vector<1x128xf32>
    %177 = vector.broadcast %176 : vector<1x128xf32> to vector<5x128xf32>
    %c1_58 = arith.constant 1 : index
    %c0_59 = arith.constant 0 : index
    %c0_60 = arith.constant 0 : index
    %178 = vector.load %arg6[%c1_58, %c0_59, %c0_60] : memref<10x5x128xf32, #tpu.memory_space<vmem>>, vector<1x5x128xf32>
    %179 = vector.shape_cast %178 : vector<1x5x128xf32> to vector<5x128xf32>
    %180 = arith.mulf %179, %177 : vector<5x128xf32>
    %181 = arith.addf %167, %180 : vector<5x128xf32>
    %182 = vector.extract_strided_slice %165 {offsets = [2, 0], sizes = [1, 128], strides = [1, 1]} : vector<10x128xf32> to vector<1x128xf32>
    %183 = vector.shape_cast %182 : vector<1x128xf32> to vector<1x128xf32>
    %184 = vector.broadcast %183 : vector<1x128xf32> to vector<5x128xf32>
    %c2_61 = arith.constant 2 : index
    %c0_62 = arith.constant 0 : index
    %c0_63 = arith.constant 0 : index
    %185 = vector.load %arg6[%c2_61, %c0_62, %c0_63] : memref<10x5x128xf32, #tpu.memory_space<vmem>>, vector<1x5x128xf32>
    %186 = vector.shape_cast %185 : vector<1x5x128xf32> to vector<5x128xf32>
    %187 = arith.mulf %186, %184 : vector<5x128xf32>
    %188 = arith.addf %174, %187 : vector<5x128xf32>
    %189 = vector.extract_strided_slice %165 {offsets = [3, 0], sizes = [1, 128], strides = [1, 1]} : vector<10x128xf32> to vector<1x128xf32>
    %190 = vector.shape_cast %189 : vector<1x128xf32> to vector<1x128xf32>
    %191 = vector.broadcast %190 : vector<1x128xf32> to vector<5x128xf32>
    %c3_64 = arith.constant 3 : index
    %c0_65 = arith.constant 0 : index
    %c0_66 = arith.constant 0 : index
    %192 = vector.load %arg6[%c3_64, %c0_65, %c0_66] : memref<10x5x128xf32, #tpu.memory_space<vmem>>, vector<1x5x128xf32>
    %193 = vector.shape_cast %192 : vector<1x5x128xf32> to vector<5x128xf32>
    %194 = arith.mulf %193, %191 : vector<5x128xf32>
    %195 = arith.addf %181, %194 : vector<5x128xf32>
    %196 = vector.extract_strided_slice %165 {offsets = [4, 0], sizes = [1, 128], strides = [1, 1]} : vector<10x128xf32> to vector<1x128xf32>
    %197 = vector.shape_cast %196 : vector<1x128xf32> to vector<1x128xf32>
    %198 = vector.broadcast %197 : vector<1x128xf32> to vector<5x128xf32>
    %c4_67 = arith.constant 4 : index
    %c0_68 = arith.constant 0 : index
    %c0_69 = arith.constant 0 : index
    %199 = vector.load %arg6[%c4_67, %c0_68, %c0_69] : memref<10x5x128xf32, #tpu.memory_space<vmem>>, vector<1x5x128xf32>
    %200 = vector.shape_cast %199 : vector<1x5x128xf32> to vector<5x128xf32>
    %201 = arith.mulf %200, %198 : vector<5x128xf32>
    %202 = arith.addf %188, %201 : vector<5x128xf32>
    %203 = vector.extract_strided_slice %165 {offsets = [5, 0], sizes = [1, 128], strides = [1, 1]} : vector<10x128xf32> to vector<1x128xf32>
    %204 = vector.shape_cast %203 : vector<1x128xf32> to vector<1x128xf32>
    %205 = vector.broadcast %204 : vector<1x128xf32> to vector<5x128xf32>
    %c5_70 = arith.constant 5 : index
    %c0_71 = arith.constant 0 : index
    %c0_72 = arith.constant 0 : index
    %206 = vector.load %arg6[%c5_70, %c0_71, %c0_72] : memref<10x5x128xf32, #tpu.memory_space<vmem>>, vector<1x5x128xf32>
    %207 = vector.shape_cast %206 : vector<1x5x128xf32> to vector<5x128xf32>
    %208 = arith.mulf %207, %205 : vector<5x128xf32>
    %209 = arith.addf %195, %208 : vector<5x128xf32>
    %210 = vector.extract_strided_slice %165 {offsets = [6, 0], sizes = [1, 128], strides = [1, 1]} : vector<10x128xf32> to vector<1x128xf32>
    %211 = vector.shape_cast %210 : vector<1x128xf32> to vector<1x128xf32>
    %212 = vector.broadcast %211 : vector<1x128xf32> to vector<5x128xf32>
    %c6_73 = arith.constant 6 : index
    %c0_74 = arith.constant 0 : index
    %c0_75 = arith.constant 0 : index
    %213 = vector.load %arg6[%c6_73, %c0_74, %c0_75] : memref<10x5x128xf32, #tpu.memory_space<vmem>>, vector<1x5x128xf32>
    %214 = vector.shape_cast %213 : vector<1x5x128xf32> to vector<5x128xf32>
    %215 = arith.mulf %214, %212 : vector<5x128xf32>
    %216 = arith.addf %202, %215 : vector<5x128xf32>
    %217 = vector.extract_strided_slice %165 {offsets = [7, 0], sizes = [1, 128], strides = [1, 1]} : vector<10x128xf32> to vector<1x128xf32>
    %218 = vector.shape_cast %217 : vector<1x128xf32> to vector<1x128xf32>
    %219 = vector.broadcast %218 : vector<1x128xf32> to vector<5x128xf32>
    %c7_76 = arith.constant 7 : index
    %c0_77 = arith.constant 0 : index
    %c0_78 = arith.constant 0 : index
    %220 = vector.load %arg6[%c7_76, %c0_77, %c0_78] : memref<10x5x128xf32, #tpu.memory_space<vmem>>, vector<1x5x128xf32>
    %221 = vector.shape_cast %220 : vector<1x5x128xf32> to vector<5x128xf32>
    %222 = arith.mulf %221, %219 : vector<5x128xf32>
    %223 = arith.addf %209, %222 : vector<5x128xf32>
    %224 = vector.extract_strided_slice %165 {offsets = [8, 0], sizes = [1, 128], strides = [1, 1]} : vector<10x128xf32> to vector<1x128xf32>
    %225 = vector.shape_cast %224 : vector<1x128xf32> to vector<1x128xf32>
    %226 = vector.broadcast %225 : vector<1x128xf32> to vector<5x128xf32>
    %c8_79 = arith.constant 8 : index
    %c0_80 = arith.constant 0 : index
    %c0_81 = arith.constant 0 : index
    %227 = vector.load %arg6[%c8_79, %c0_80, %c0_81] : memref<10x5x128xf32, #tpu.memory_space<vmem>>, vector<1x5x128xf32>
    %228 = vector.shape_cast %227 : vector<1x5x128xf32> to vector<5x128xf32>
    %229 = arith.mulf %228, %226 : vector<5x128xf32>
    %230 = arith.addf %216, %229 : vector<5x128xf32>
    %231 = vector.extract_strided_slice %165 {offsets = [9, 0], sizes = [1, 128], strides = [1, 1]} : vector<10x128xf32> to vector<1x128xf32>
    %232 = vector.shape_cast %231 : vector<1x128xf32> to vector<1x128xf32>
    %233 = vector.broadcast %232 : vector<1x128xf32> to vector<5x128xf32>
    %c9_82 = arith.constant 9 : index
    %c0_83 = arith.constant 0 : index
    %c0_84 = arith.constant 0 : index
    %234 = vector.load %arg6[%c9_82, %c0_83, %c0_84] : memref<10x5x128xf32, #tpu.memory_space<vmem>>, vector<1x5x128xf32>
    %235 = vector.shape_cast %234 : vector<1x5x128xf32> to vector<5x128xf32>
    %236 = arith.mulf %235, %233 : vector<5x128xf32>
    %237 = arith.addf %223, %236 : vector<5x128xf32>
    %238 = arith.addf %230, %237 : vector<5x128xf32>
    %239 = math.tanh %238 : vector<5x128xf32>
    %c0_85 = arith.constant 0 : index
    %c0_86 = arith.constant 0 : index
    %240 = vector.load %arg9[%c0_85, %c0_86] : memref<5x128xf32, #tpu.memory_space<vmem>>, vector<5x128xf32>
    %241 = vector.extract_strided_slice %239 {offsets = [0, 0], sizes = [1, 128], strides = [1, 1]} : vector<5x128xf32> to vector<1x128xf32>
    %242 = vector.shape_cast %241 : vector<1x128xf32> to vector<1x128xf32>
    %243 = vector.broadcast %242 : vector<1x128xf32> to vector<5x128xf32>
    %c0_87 = arith.constant 0 : index
    %c0_88 = arith.constant 0 : index
    %c0_89 = arith.constant 0 : index
    %244 = vector.load %arg8[%c0_87, %c0_88, %c0_89] : memref<5x5x128xf32, #tpu.memory_space<vmem>>, vector<1x5x128xf32>
    %245 = vector.shape_cast %244 : vector<1x5x128xf32> to vector<5x128xf32>
    %246 = arith.mulf %245, %243 : vector<5x128xf32>
    %247 = arith.addf %240, %246 : vector<5x128xf32>
    %248 = vector.extract_strided_slice %239 {offsets = [1, 0], sizes = [1, 128], strides = [1, 1]} : vector<5x128xf32> to vector<1x128xf32>
    %249 = vector.shape_cast %248 : vector<1x128xf32> to vector<1x128xf32>
    %250 = vector.broadcast %249 : vector<1x128xf32> to vector<5x128xf32>
    %c1_90 = arith.constant 1 : index
    %c0_91 = arith.constant 0 : index
    %c0_92 = arith.constant 0 : index
    %251 = vector.load %arg8[%c1_90, %c0_91, %c0_92] : memref<5x5x128xf32, #tpu.memory_space<vmem>>, vector<1x5x128xf32>
    %252 = vector.shape_cast %251 : vector<1x5x128xf32> to vector<5x128xf32>
    %253 = arith.mulf %252, %250 : vector<5x128xf32>
    %254 = arith.addf %247, %253 : vector<5x128xf32>
    %255 = vector.extract_strided_slice %239 {offsets = [2, 0], sizes = [1, 128], strides = [1, 1]} : vector<5x128xf32> to vector<1x128xf32>
    %256 = vector.shape_cast %255 : vector<1x128xf32> to vector<1x128xf32>
    %257 = vector.broadcast %256 : vector<1x128xf32> to vector<5x128xf32>
    %c2_93 = arith.constant 2 : index
    %c0_94 = arith.constant 0 : index
    %c0_95 = arith.constant 0 : index
    %258 = vector.load %arg8[%c2_93, %c0_94, %c0_95] : memref<5x5x128xf32, #tpu.memory_space<vmem>>, vector<1x5x128xf32>
    %259 = vector.shape_cast %258 : vector<1x5x128xf32> to vector<5x128xf32>
    %260 = arith.mulf %259, %257 : vector<5x128xf32>
    %261 = arith.addf %254, %260 : vector<5x128xf32>
    %262 = vector.extract_strided_slice %239 {offsets = [3, 0], sizes = [1, 128], strides = [1, 1]} : vector<5x128xf32> to vector<1x128xf32>
    %263 = vector.shape_cast %262 : vector<1x128xf32> to vector<1x128xf32>
    %264 = vector.broadcast %263 : vector<1x128xf32> to vector<5x128xf32>
    %c3_96 = arith.constant 3 : index
    %c0_97 = arith.constant 0 : index
    %c0_98 = arith.constant 0 : index
    %265 = vector.load %arg8[%c3_96, %c0_97, %c0_98] : memref<5x5x128xf32, #tpu.memory_space<vmem>>, vector<1x5x128xf32>
    %266 = vector.shape_cast %265 : vector<1x5x128xf32> to vector<5x128xf32>
    %267 = arith.mulf %266, %264 : vector<5x128xf32>
    %268 = arith.addf %261, %267 : vector<5x128xf32>
    %269 = vector.extract_strided_slice %239 {offsets = [4, 0], sizes = [1, 128], strides = [1, 1]} : vector<5x128xf32> to vector<1x128xf32>
    %270 = vector.shape_cast %269 : vector<1x128xf32> to vector<1x128xf32>
    %271 = vector.broadcast %270 : vector<1x128xf32> to vector<5x128xf32>
    %c4_99 = arith.constant 4 : index
    %c0_100 = arith.constant 0 : index
    %c0_101 = arith.constant 0 : index
    %272 = vector.load %arg8[%c4_99, %c0_100, %c0_101] : memref<5x5x128xf32, #tpu.memory_space<vmem>>, vector<1x5x128xf32>
    %273 = vector.shape_cast %272 : vector<1x5x128xf32> to vector<5x128xf32>
    %274 = arith.mulf %273, %271 : vector<5x128xf32>
    %275 = arith.addf %268, %274 : vector<5x128xf32>
    %276 = math.tanh %275 : vector<5x128xf32>
    %c0_102 = arith.constant 0 : index
    %c0_103 = arith.constant 0 : index
    %277 = vector.load %arg10[%c0_102, %c0_103] : memref<5x128xf32, #tpu.memory_space<vmem>>, vector<5x128xf32>
    %278 = arith.mulf %277, %276 : vector<5x128xf32>
    %cst_104 = arith.constant dense<0.000000e+00> : vector<128xf32>
    %279 = vector.multi_reduction <add>, %278, %cst_104 [0] : vector<5x128xf32> to vector<128xf32>
    %280 = vector.shape_cast %279 : vector<128xf32> to vector<1x128xf32>
    %c0_105 = arith.constant 0 : index
    %c0_106 = arith.constant 0 : index
    %281 = vector.load %arg11[%c0_105, %c0_106] : memref<1x128xf32, #tpu.memory_space<vmem>>, vector<1x128xf32>
    %282 = arith.addf %280, %281 : vector<1x128xf32>
    %c0_107 = arith.constant 0 : index
    %283 = arith.index_cast %3 : i32 to index
    %284 = vector.load %arg12[%c0_107, %283] : memref<1x128xf32, #tpu.memory_space<vmem>>, vector<1x128xf32>
    tpu.vector_store %arg12[%c0_107, %283], %282 {strides = array<i32>} : memref<1x128xf32, #tpu.memory_space<vmem>>, vector<1x128xf32>,
    %c1_i32_108 = arith.constant 1 : i32
    return
  }
  func.func @transform_0(%arg0: i32) -> (i32, i32) {
    %c0_i32 = arith.constant 0 : i32
    %c0_i32_0 = arith.constant 0 : i32
    return %c0_i32, %arg0 : i32, i32
  }
  func.func @transform_1(%arg0: i32) -> (i32, i32, i32) {
    %c0_i32 = arith.constant 0 : i32
    %c0_i32_0 = arith.constant 0 : i32
    %c0_i32_1 = arith.constant 0 : i32
    %c0_i32_2 = arith.constant 0 : i32
    return %c0_i32, %c0_i32_0, %c0_i32_1 : i32, i32, i32
  }
  func.func @transform_2(%arg0: i32) -> (i32, i32) {
    %c0_i32 = arith.constant 0 : i32
    %c0_i32_0 = arith.constant 0 : i32
    %c0_i32_1 = arith.constant 0 : i32
    return %c0_i32, %c0_i32_0 : i32, i32
  }
  func.func @transform_3(%arg0: i32) -> (i32, i32, i32) {
    %c0_i32 = arith.constant 0 : i32
    %c0_i32_0 = arith.constant 0 : i32
    %c0_i32_1 = arith.constant 0 : i32
    %c0_i32_2 = arith.constant 0 : i32
    return %c0_i32, %c0_i32_0, %c0_i32_1 : i32, i32, i32
  }
  func.func @transform_4(%arg0: i32) -> (i32, i32) {
    %c0_i32 = arith.constant 0 : i32
    %c0_i32_0 = arith.constant 0 : i32
    %c0_i32_1 = arith.constant 0 : i32
    return %c0_i32, %c0_i32_0 : i32, i32
  }
  func.func @transform_5(%arg0: i32) -> (i32, i32, i32) {
    %c0_i32 = arith.constant 0 : i32
    %c0_i32_0 = arith.constant 0 : i32
    %c0_i32_1 = arith.constant 0 : i32
    %c0_i32_2 = arith.constant 0 : i32
    return %c0_i32, %c0_i32_0, %c0_i32_1 : i32, i32, i32
  }
  func.func @transform_6(%arg0: i32) -> (i32, i32) {
    %c0_i32 = arith.constant 0 : i32
    %c0_i32_0 = arith.constant 0 : i32
    %c0_i32_1 = arith.constant 0 : i32
    return %c0_i32, %c0_i32_0 : i32, i32
  }
  func.func @transform_7(%arg0: i32) -> (i32, i32, i32) {
    %c0_i32 = arith.constant 0 : i32
    %c0_i32_0 = arith.constant 0 : i32
    %c0_i32_1 = arith.constant 0 : i32
    %c0_i32_2 = arith.constant 0 : i32
    return %c0_i32, %c0_i32_0, %c0_i32_1 : i32, i32, i32
  }
  func.func @transform_8(%arg0: i32) -> (i32, i32) {
    %c0_i32 = arith.constant 0 : i32
    %c0_i32_0 = arith.constant 0 : i32
    %c0_i32_1 = arith.constant 0 : i32
    return %c0_i32, %c0_i32_0 : i32, i32
  }
  func.func @transform_9(%arg0: i32) -> (i32, i32) {
    %c0_i32 = arith.constant 0 : i32
    %c0_i32_0 = arith.constant 0 : i32
    %c0_i32_1 = arith.constant 0 : i32
    return %c0_i32, %c0_i32_0 : i32, i32
  }
  func.func @transform_10(%arg0: i32) -> (i32, i32) {
    %c0_i32 = arith.constant 0 : i32
    %c0_i32_0 = arith.constant 0 : i32
    %c0_i32_1 = arith.constant 0 : i32
    return %c0_i32, %c0_i32_0 : i32, i32
  }
  func.func @transform_11(%arg0: i32) -> (i32, i32) {
    %c0_i32 = arith.constant 0 : i32
    %c0_i32_0 = arith.constant 0 : i32
    return %c0_i32, %arg0 : i32, i32
  }
}

</mosaic_0001>

<llo_original>
// kernel: tpu_custom_call.1
$region0: #{tpu_custom_call.1}
  #allocation0 [shape = 'u32[]', space=smem, size = 0x4, offset = 0x4, fixed_abs, tag = 'smem constant byte address 0x4 - core index']
  #allocation1 [shape = 'u32[144,128]{1,0:T(1,128)}', space=vmem, size = 0x12000, scoped, tag = 'internal scratch']
  %s0 = inlined_call_operand.vmem [shape: f32[2,128], index: 0, kind: input, shape index: {}]
  %s1 = inlined_call_operand.vmem [shape: f32[2,20,128], index: 1, kind: input, shape index: {}]
  %s2 = inlined_call_operand.vmem [shape: f32[20,128], index: 2, kind: input, shape index: {}]
  %s3 = inlined_call_operand.vmem [shape: f32[20,10,128], index: 3, kind: input, shape index: {}]
  %s4 = inlined_call_operand.vmem [shape: f32[10,128], index: 4, kind: input, shape index: {}]
  %s5 = inlined_call_operand.vmem [shape: f32[10,5,128], index: 5, kind: input, shape index: {}]
  %s6 = inlined_call_operand.vmem [shape: f32[5,128], index: 6, kind: input, shape index: {}]
  %s7 = inlined_call_operand.vmem [shape: f32[5,5,128], index: 7, kind: input, shape index: {}]
  %s8 = inlined_call_operand.vmem [shape: f32[5,128], index: 8, kind: input, shape index: {}]
  %s9 = inlined_call_operand.vmem [shape: f32[5,128], index: 9, kind: input, shape index: {}]
  %s10 = inlined_call_operand.vmem [shape: f32[1,128], index: 10, kind: input, shape index: {}]
  %s11 = inlined_call_operand.hbm [shape: f32[1,128], index: 11, kind: output, shape index: {}]
  %s12 = sld [smem:[#allocation0]]
  $region54: #{tpu_custom_call.1} parent=0
    _
  %s14 = ssub.s32 1, %s12
  %s15 = scalar_select 0, %s14, %s12
  $region1: #{tpu_custom_call.1} parent=0
    #allocation2 [shape = 'u8[512]{0}', space=vmem, size = 0x400, scoped, tag = 'output window, operand 0, single buffered']
    #allocation3 [shape = 's32[1]{0}', space=sflag, size = 0x4, scoped, tag = 'scoped memory for tpu_custom_call.1']
    %16 = vsyncpa [#allocation3], 0
    // Predicated region
    $region2: #{tpu_custom_call.1} parent=1 // pred_check
      _
    $region3: #{tpu_custom_call.1} parent=1 // pred_check_branch
      %18 = sbr.rel (0) target = $region5
    $region4: #{tpu_custom_call.1} parent=1 // pred_region
      _
    $region5: #{tpu_custom_call.1} parent=1 // pred_fallthru
      _
    // Predicated region
    $region6: #{tpu_custom_call.1} parent=1 // pred_check
      _
    $region7: #{tpu_custom_call.1} parent=1 // pred_check_branch
      %20 = sbr.rel (0) target = $region9
    $region8: #{tpu_custom_call.1} parent=1 // pred_region
      _
    $region9: #{tpu_custom_call.1} parent=1 // pred_fallthru
      _
    // Predicated region
    $region10: #{tpu_custom_call.1} parent=1 // pred_check
      _
    $region11: #{tpu_custom_call.1} parent=1 // pred_check_branch
      %22 = sbr.rel (0) target = $region13
    $region12: #{tpu_custom_call.1} parent=1 // pred_region
      _
    $region13: #{tpu_custom_call.1} parent=1 // pred_fallthru
      _
    // Predicated region
    $region14: #{tpu_custom_call.1} parent=1 // pred_check
      _
    $region15: #{tpu_custom_call.1} parent=1 // pred_check_branch
      %24 = sbr.rel (0) target = $region17
    $region16: #{tpu_custom_call.1} parent=1 // pred_region
      _
    $region17: #{tpu_custom_call.1} parent=1 // pred_fallthru
      _
    // Predicated region
    $region18: #{tpu_custom_call.1} parent=1 // pred_check
      _
    $region19: #{tpu_custom_call.1} parent=1 // pred_check_branch
      %26 = sbr.rel (0) target = $region21
    $region20: #{tpu_custom_call.1} parent=1 // pred_region
      _
    $region21: #{tpu_custom_call.1} parent=1 // pred_fallthru
      _
    // Predicated region
    $region22: #{tpu_custom_call.1} parent=1 // pred_check
      _
    $region23: #{tpu_custom_call.1} parent=1 // pred_check_branch
      %28 = sbr.rel (0) target = $region25
    $region24: #{tpu_custom_call.1} parent=1 // pred_region
      _
    $region25: #{tpu_custom_call.1} parent=1 // pred_fallthru
      _
    // Predicated region
    $region26: #{tpu_custom_call.1} parent=1 // pred_check
      _
    $region27: #{tpu_custom_call.1} parent=1 // pred_check_branch
      %30 = sbr.rel (0) target = $region29
    $region28: #{tpu_custom_call.1} parent=1 // pred_region
      _
    $region29: #{tpu_custom_call.1} parent=1 // pred_fallthru
      _
    // Predicated region
    $region30: #{tpu_custom_call.1} parent=1 // pred_check
      _
    $region31: #{tpu_custom_call.1} parent=1 // pred_check_branch
      %32 = sbr.rel (0) target = $region33
    $region32: #{tpu_custom_call.1} parent=1 // pred_region
      _
    $region33: #{tpu_custom_call.1} parent=1 // pred_fallthru
      _
    // Predicated region
    $region34: #{tpu_custom_call.1} parent=1 // pred_check
      _
    $region35: #{tpu_custom_call.1} parent=1 // pred_check_branch
      %34 = sbr.rel (0) target = $region37
    $region36: #{tpu_custom_call.1} parent=1 // pred_region
      _
    $region37: #{tpu_custom_call.1} parent=1 // pred_fallthru
      _
    // Predicated region
    $region38: #{tpu_custom_call.1} parent=1 // pred_check
      _
    $region39: #{tpu_custom_call.1} parent=1 // pred_check_branch
      %36 = sbr.rel (0) target = $region41
    $region40: #{tpu_custom_call.1} parent=1 // pred_region
      _
    $region41: #{tpu_custom_call.1} parent=1 // pred_fallthru
      _
    // Predicated region
    $region42: #{tpu_custom_call.1} parent=1 // pred_check
      _
    $region43: #{tpu_custom_call.1} parent=1 // pred_check_branch
      %38 = sbr.rel (0) target = $region45
    $region44: #{tpu_custom_call.1} parent=1 // pred_region
      _
    $region45: #{tpu_custom_call.1} parent=1 // pred_fallthru
      _
    %v39 = vld [vmem:[%s0] sm:$0x3]
    %v40 = vld [vmem:[%s2] sm:$0xff]
    %v41 = vld [vmem:[%s2 + $0x8] sm:$0xff]
    %v42 = vld [vmem:[%s2 + $0x10] sm:$0xf]
    %v43 = vlaneseq
    %v44 = vshrl.u32 %v43, 7
    %v45 = vsub.s32 0, %v44
    %v46 = vrot.slane %v39, %v45
    %v47 = vld [vmem:[%s1] sm:$0xff]
    %v48 = vld [vmem:[%s1 + $0x8] sm:$0xff]
    %v49 = vld [vmem:[%s1 + $0x10] sm:$0xf]
    %v50 = vmul.f32 %v47, %v46
    %v51 = vmul.f32 %v48, %v46
    %v52 = vmul.f32 %v49, %v46
    %v53 = vadd.f32 %v40, %v50
    %v54 = vadd.f32 %v41, %v51
    %v55 = vadd.f32 %v42, %v52
    %v56 = vlaneseq
    %v57 = vshrl.u32 %v56, 7
    %v58 = vsub.s32 1, %v57
    %v59 = vrot.slane %v39, %v58
    %s60 = scalar_lea.vmem %s1, 24
    %v61 = vld [vmem:[%s60] sm:$0xff]
    %v62 = vld [vmem:[%s60 + $0x8] sm:$0xff]
    %v63 = vld [vmem:[%s60 + $0x10] sm:$0xf]
    %v64 = vmul.f32 %v61, %v59
    %v65 = vmul.f32 %v62, %v59
    %v66 = vmul.f32 %v63, %v59
    %v67 = vadd.f32 %v53, %v64
    %v68 = vadd.f32 %v54, %v65
    %v69 = vadd.f32 %v55, %v66
    %v70 = vtanh.pop %v67
    %v71 = vtanh.pop %v68
    %v72 = vtanh.pop %v69
    %v73 = vld [vmem:[%s4] sm:$0xff]
    %v74 = vld [vmem:[%s4 + $0x8] sm:$0x3]
    %v75 = vlaneseq
    %v76 = vshrl.u32 %v75, 7
    %v77 = vsub.s32 0, %v76
    %v78 = vrot.slane %v70, %v77
    %v79 = vld [vmem:[%s3] sm:$0xff]
    %v80 = vld [vmem:[%s3 + $0x8] sm:$0x3]
    %v81 = vmul.f32 %v79, %v78
    %v82 = vmul.f32 %v80, %v78
    %v83 = vadd.f32 %v73, %v81
    %v84 = vadd.f32 %v74, %v82
    %v85 = vlaneseq
    %v86 = vshrl.u32 %v85, 7
    %v87 = vsub.s32 1, %v86
    %v88 = vrot.slane %v70, %v87
    %s89 = scalar_lea.vmem %s3, 16
    %v90 = vld [vmem:[%s89] sm:$0xff]
    %v91 = vld [vmem:[%s89 + $0x8] sm:$0x3]
    %v92 = vmul.f32 %v90, %v88
    %v93 = vmul.f32 %v91, %v88
    %v94 = vadd.f32 %v92, 0.0
    %v95 = vadd.f32 %v93, 0.0
    %v96 = vlaneseq
    %v97 = vshrl.u32 %v96, 7
    %v98 = vsub.s32 2, %v97
    %v99 = vrot.slane %v70, %v98
    %s100 = scalar_lea.vmem %s3, 32
    %v101 = vld [vmem:[%s100] sm:$0xff]
    %v102 = vld [vmem:[%s100 + $0x8] sm:$0x3]
    %v103 = vmul.f32 %v101, %v99
    %v104 = vmul.f32 %v102, %v99
    %v105 = vadd.f32 %v83, %v103
    %v106 = vadd.f32 %v84, %v104
    %v107 = vlaneseq
    %v108 = vshrl.u32 %v107, 7
    %v109 = vsub.s32 3, %v108
    %v110 = vrot.slane %v70, %v109
    %s111 = scalar_lea.vmem %s3, 48
    %v112 = vld [vmem:[%s111] sm:$0xff]
    %v113 = vld [vmem:[%s111 + $0x8] sm:$0x3]
    %v114 = vmul.f32 %v112, %v110
    %v115 = vmul.f32 %v113, %v110
    %v116 = vadd.f32 %v94, %v114
    %v117 = vadd.f32 %v95, %v115
    %v118 = vlaneseq
    %v119 = vshrl.u32 %v118, 7
    %v120 = vsub.s32 4, %v119
    %v121 = vrot.slane %v70, %v120
    %s122 = scalar_lea.vmem %s3, 64
    %v123 = vld [vmem:[%s122] sm:$0xff]
    %v124 = vld [vmem:[%s122 + $0x8] sm:$0x3]
    %v125 = vmul.f32 %v123, %v121
    %v126 = vmul.f32 %v124, %v121
    %v127 = vadd.f32 %v105, %v125
    %v128 = vadd.f32 %v106, %v126
    %v129 = vlaneseq
    %v130 = vshrl.u32 %v129, 7
    %v131 = vsub.s32 5, %v130
    %v132 = vrot.slane %v70, %v131
    %s133 = scalar_lea.vmem %s3, 80
    %v134 = vld [vmem:[%s133] sm:$0xff]
    %v135 = vld [vmem:[%s133 + $0x8] sm:$0x3]
    %v136 = vmul.f32 %v134, %v132
    %v137 = vmul.f32 %v135, %v132
    %v138 = vadd.f32 %v116, %v136
    %v139 = vadd.f32 %v117, %v137
    %v140 = vlaneseq
    %v141 = vshrl.u32 %v140, 7
    %v142 = vsub.s32 6, %v141
    %v143 = vrot.slane %v70, %v142
    %s144 = scalar_lea.vmem %s3, 96
    %v145 = vld [vmem:[%s144] sm:$0xff]
    %v146 = vld [vmem:[%s144 + $0x8] sm:$0x3]
    %v147 = vmul.f32 %v145, %v143
    %v148 = vmul.f32 %v146, %v143
    %v149 = vadd.f32 %v127, %v147
    %v150 = vadd.f32 %v128, %v148
    %v151 = vlaneseq
    %v152 = vshrl.u32 %v151, 7
    %v153 = vsub.s32 7, %v152
    %v154 = vrot.slane %v70, %v153
    %s155 = scalar_lea.vmem %s3, 112
    %v156 = vld [vmem:[%s155] sm:$0xff]
    %v157 = vld [vmem:[%s155 + $0x8] sm:$0x3]
    %v158 = vmul.f32 %v156, %v154
    %v159 = vmul.f32 %v157, %v154
    %v160 = vadd.f32 %v138, %v158
    %v161 = vadd.f32 %v139, %v159
    %v162 = vlaneseq
    %v163 = vshrl.u32 %v162, 7
    %v164 = vsub.s32 0, %v163
    %v165 = vrot.slane %v71, %v164
    %s166 = scalar_lea.vmem %s3, 128
    %v167 = vld [vmem:[%s166] sm:$0xff]
    %v168 = vld [vmem:[%s166 + $0x8] sm:$0x3]
    %v169 = vmul.f32 %v167, %v165
    %v170 = vmul.f32 %v168, %v165
    %v171 = vadd.f32 %v149, %v169
    %v172 = vadd.f32 %v150, %v170
    %v173 = vlaneseq
    %v174 = vshrl.u32 %v173, 7
    %v175 = vsub.s32 1, %v174
    %v176 = vrot.slane %v71, %v175
    %s177 = scalar_lea.vmem %s3, 144
    %v178 = vld [vmem:[%s177] sm:$0xff]
    %v179 = vld [vmem:[%s177 + $0x8] sm:$0x3]
    %v180 = vmul.f32 %v178, %v176
    %v181 = vmul.f32 %v179, %v176
    %v182 = vadd.f32 %v160, %v180
    %v183 = vadd.f32 %v161, %v181
    %v184 = vlaneseq
    %v185 = vshrl.u32 %v184, 7
    %v186 = vsub.s32 2, %v185
    %v187 = vrot.slane %v71, %v186
    %s188 = scalar_lea.vmem %s3, 160
    %v189 = vld [vmem:[%s188] sm:$0xff]
    %v190 = vld [vmem:[%s188 + $0x8] sm:$0x3]
    %v191 = vmul.f32 %v189, %v187
    %v192 = vmul.f32 %v190, %v187
    %v193 = vadd.f32 %v171, %v191
    %v194 = vadd.f32 %v172, %v192
    %v195 = vlaneseq
    %v196 = vshrl.u32 %v195, 7
    %v197 = vsub.s32 3, %v196
    %v198 = vrot.slane %v71, %v197
    %s199 = scalar_lea.vmem %s3, 176
    %v200 = vld [vmem:[%s199] sm:$0xff]
    %v201 = vld [vmem:[%s199 + $0x8] sm:$0x3]
    %v202 = vmul.f32 %v200, %v198
    %v203 = vmul.f32 %v201, %v198
    %v204 = vadd.f32 %v182, %v202
    %v205 = vadd.f32 %v183, %v203
    %v206 = vlaneseq
    %v207 = vshrl.u32 %v206, 7
    %v208 = vsub.s32 4, %v207
    %v209 = vrot.slane %v71, %v208
    %s210 = scalar_lea.vmem %s3, 192
    %v211 = vld [vmem:[%s210] sm:$0xff]
    %v212 = vld [vmem:[%s210 + $0x8] sm:$0x3]
    %v213 = vmul.f32 %v211, %v209
    %v214 = vmul.f32 %v212, %v209
    %v215 = vadd.f32 %v193, %v213
    %v216 = vadd.f32 %v194, %v214
    %v217 = vlaneseq
    %v218 = vshrl.u32 %v217, 7
    %v219 = vsub.s32 5, %v218
    %v220 = vrot.slane %v71, %v219
    %s221 = scalar_lea.vmem %s3, 208
    %v222 = vld [vmem:[%s221] sm:$0xff]
    %v223 = vld [vmem:[%s221 + $0x8] sm:$0x3]
    %v224 = vmul.f32 %v222, %v220
    %v225 = vmul.f32 %v223, %v220
    %v226 = vadd.f32 %v204, %v224
    %v227 = vadd.f32 %v205, %v225
    %v228 = vlaneseq
    %v229 = vshrl.u32 %v228, 7
    %v230 = vsub.s32 6, %v229
    %v231 = vrot.slane %v71, %v230
    %s232 = scalar_lea.vmem %s3, 224
    %v233 = vld [vmem:[%s232] sm:$0xff]
    %v234 = vld [vmem:[%s232 + $0x8] sm:$0x3]
    %v235 = vmul.f32 %v233, %v231
    %v236 = vmul.f32 %v234, %v231
    %v237 = vadd.f32 %v215, %v235
    %v238 = vadd.f32 %v216, %v236
    %v239 = vlaneseq
    %v240 = vshrl.u32 %v239, 7
    %v241 = vsub.s32 7, %v240
    %v242 = vrot.slane %v71, %v241
    %s243 = scalar_lea.vmem %s3, 240
    %v244 = vld [vmem:[%s243] sm:$0xff]
    %v245 = vld [vmem:[%s243 + $0x8] sm:$0x3]
    %v246 = vmul.f32 %v244, %v242
    %v247 = vmul.f32 %v245, %v242
    %v248 = vadd.f32 %v226, %v246
    %v249 = vadd.f32 %v227, %v247
    %v250 = vlaneseq
    %v251 = vshrl.u32 %v250, 7
    %v252 = vsub.s32 0, %v251
    %v253 = vrot.slane %v72, %v252
    %s254 = scalar_lea.vmem %s3, 256
    %v255 = vld [vmem:[%s254] sm:$0xff]
    %v256 = vld [vmem:[%s254 + $0x8] sm:$0x3]
    %v257 = vmul.f32 %v255, %v253
    %v258 = vmul.f32 %v256, %v253
    %v259 = vadd.f32 %v237, %v257
    %v260 = vadd.f32 %v238, %v258
    %v261 = vlaneseq
    %v262 = vshrl.u32 %v261, 7
    %v263 = vsub.s32 1, %v262
    %v264 = vrot.slane %v72, %v263
    %s265 = scalar_lea.vmem %s3, 272
    %v266 = vld [vmem:[%s265] sm:$0xff]
    %v267 = vld [vmem:[%s265 + $0x8] sm:$0x3]
    %v268 = vmul.f32 %v266, %v264
    %v269 = vmul.f32 %v267, %v264
    %v270 = vadd.f32 %v248, %v268
    %v271 = vadd.f32 %v249, %v269
    %v272 = vlaneseq
    %v273 = vshrl.u32 %v272, 7
    %v274 = vsub.s32 2, %v273
    %v275 = vrot.slane %v72, %v274
    %s276 = scalar_lea.vmem %s3, 288
    %v277 = vld [vmem:[%s276] sm:$0xff]
    %v278 = vld [vmem:[%s276 + $0x8] sm:$0x3]
    %v279 = vmul.f32 %v277, %v275
    %v280 = vmul.f32 %v278, %v275
    %v281 = vadd.f32 %v259, %v279
    %v282 = vadd.f32 %v260, %v280
    %v283 = vlaneseq
    %v284 = vshrl.u32 %v283, 7
    %v285 = vsub.s32 3, %v284
    %v286 = vrot.slane %v72, %v285
    %s287 = scalar_lea.vmem %s3, 304
    %v288 = vld [vmem:[%s287] sm:$0xff]
    %v289 = vld [vmem:[%s287 + $0x8] sm:$0x3]
    %v290 = vmul.f32 %v288, %v286
    %v291 = vmul.f32 %v289, %v286
    %v292 = vadd.f32 %v270, %v290
    %v293 = vadd.f32 %v271, %v291
    %v294 = vadd.f32 %v281, %v292
    %v295 = vadd.f32 %v282, %v293
    %v296 = vtanh.pop %v294
    %v297 = vtanh.pop %v295
    %v298 = vld [vmem:[%s6] sm:$0x1f]
    %v299 = vlaneseq
    %v300 = vshrl.u32 %v299, 7
    %v301 = vsub.s32 0, %v300
    %v302 = vrot.slane %v296, %v301
    %v303 = vld [vmem:[%s5] sm:$0x1f]
    %v304 = vmul.f32 %v303, %v302
    %v305 = vadd.f32 %v298, %v304
    %v306 = vlaneseq
    %v307 = vshrl.u32 %v306, 7
    %v308 = vsub.s32 1, %v307
    %v309 = vrot.slane %v296, %v308
    %s310 = scalar_lea.vmem %s5, 8
    %v311 = vld [vmem:[%s310] sm:$0x1f]
    %v312 = vmul.f32 %v311, %v309
    %v313 = vadd.f32 %v312, 0.0
    %v314 = vlaneseq
    %v315 = vshrl.u32 %v314, 7
    %v316 = vsub.s32 2, %v315
    %v317 = vrot.slane %v296, %v316
    %s318 = scalar_lea.vmem %s5, 16
    %v319 = vld [vmem:[%s318] sm:$0x1f]
    %v320 = vmul.f32 %v319, %v317
    %v321 = vadd.f32 %v305, %v320
    %v322 = vlaneseq
    %v323 = vshrl.u32 %v322, 7
    %v324 = vsub.s32 3, %v323
    %v325 = vrot.slane %v296, %v324
    %s326 = scalar_lea.vmem %s5, 24
    %v327 = vld [vmem:[%s326] sm:$0x1f]
    %v328 = vmul.f32 %v327, %v325
    %v329 = vadd.f32 %v313, %v328
    %v330 = vlaneseq
    %v331 = vshrl.u32 %v330, 7
    %v332 = vsub.s32 4, %v331
    %v333 = vrot.slane %v296, %v332
    %s334 = scalar_lea.vmem %s5, 32
    %v335 = vld [vmem:[%s334] sm:$0x1f]
    %v336 = vmul.f32 %v335, %v333
    %v337 = vadd.f32 %v321, %v336
    %v338 = vlaneseq
    %v339 = vshrl.u32 %v338, 7
    %v340 = vsub.s32 5, %v339
    %v341 = vrot.slane %v296, %v340
    %s342 = scalar_lea.vmem %s5, 40
    %v343 = vld [vmem:[%s342] sm:$0x1f]
    %v344 = vmul.f32 %v343, %v341
    %v345 = vadd.f32 %v329, %v344
    %v346 = vlaneseq
    %v347 = vshrl.u32 %v346, 7
    %v348 = vsub.s32 6, %v347
    %v349 = vrot.slane %v296, %v348
    %s350 = scalar_lea.vmem %s5, 48
    %v351 = vld [vmem:[%s350] sm:$0x1f]
    %v352 = vmul.f32 %v351, %v349
    %v353 = vadd.f32 %v337, %v352
    %v354 = vlaneseq
    %v355 = vshrl.u32 %v354, 7
    %v356 = vsub.s32 7, %v355
    %v357 = vrot.slane %v296, %v356
    %s358 = scalar_lea.vmem %s5, 56
    %v359 = vld [vmem:[%s358] sm:$0x1f]
    %v360 = vmul.f32 %v359, %v357
    %v361 = vadd.f32 %v345, %v360
    %v362 = vlaneseq
    %v363 = vshrl.u32 %v362, 7
    %v364 = vsub.s32 0, %v363
    %v365 = vrot.slane %v297, %v364
    %s366 = scalar_lea.vmem %s5, 64
    %v367 = vld [vmem:[%s366] sm:$0x1f]
    %v368 = vmul.f32 %v367, %v365
    %v369 = vadd.f32 %v353, %v368
    %v370 = vlaneseq
    %v371 = vshrl.u32 %v370, 7
    %v372 = vsub.s32 1, %v371
    %v373 = vrot.slane %v297, %v372
    %s374 = scalar_lea.vmem %s5, 72
    %v375 = vld [vmem:[%s374] sm:$0x1f]
    %v376 = vmul.f32 %v375, %v373
    %v377 = vadd.f32 %v361, %v376
    %v378 = vadd.f32 %v369, %v377
    %v379 = vtanh.pop %v378
    %v380 = vld [vmem:[%s8] sm:$0x1f]
    %v381 = vlaneseq
    %v382 = vshrl.u32 %v381, 7
    %v383 = vsub.s32 0, %v382
    %v384 = vrot.slane %v379, %v383
    %v385 = vld [vmem:[%s7] sm:$0x1f]
    %v386 = vmul.f32 %v385, %v384
    %v387 = vadd.f32 %v380, %v386
    %v388 = vlaneseq
    %v389 = vshrl.u32 %v388, 7
    %v390 = vsub.s32 1, %v389
    %v391 = vrot.slane %v379, %v390
    %s392 = scalar_lea.vmem %s7, 8
    %v393 = vld [vmem:[%s392] sm:$0x1f]
    %v394 = vmul.f32 %v393, %v391
    %v395 = vadd.f32 %v387, %v394
    %v396 = vlaneseq
    %v397 = vshrl.u32 %v396, 7
    %v398 = vsub.s32 2, %v397
    %v399 = vrot.slane %v379, %v398
    %s400 = scalar_lea.vmem %s7, 16
    %v401 = vld [vmem:[%s400] sm:$0x1f]
    %v402 = vmul.f32 %v401, %v399
    %v403 = vadd.f32 %v395, %v402
    %v404 = vlaneseq
    %v405 = vshrl.u32 %v404, 7
    %v406 = vsub.s32 3, %v405
    %v407 = vrot.slane %v379, %v406
    %s408 = scalar_lea.vmem %s7, 24
    %v409 = vld [vmem:[%s408] sm:$0x1f]
    %v410 = vmul.f32 %v409, %v407
    %v411 = vadd.f32 %v403, %v410
    %v412 = vlaneseq
    %v413 = vshrl.u32 %v412, 7
    %v414 = vsub.s32 4, %v413
    %v415 = vrot.slane %v379, %v414
    %s416 = scalar_lea.vmem %s7, 32
    %v417 = vld [vmem:[%s416] sm:$0x1f]
    %v418 = vmul.f32 %v417, %v415
    %v419 = vadd.f32 %v411, %v418
    %v420 = vtanh.pop %v419
    %v421 = vld [vmem:[%s9] sm:$0x1f]
    %v422 = vmul.f32 %v421, %v420
    %vm423 = vcmask 1044480
    %v424 = vsel %vm423, %v422, 0.0
    %v425 = vrot.slane %v424, 4
    %v426 = vadd.f32 %v424, %v425
    %v427 = vrot.slane %v426, 2
    %v428 = vadd.f32 %v426, %v427
    %v429 = vrot.slane %v428, 1
    %v430 = vadd.f32 %v428, %v429
    %v431 = vld [vmem:[%s10] sm:$0x1]
    %v432 = vadd.f32 %v430, %v431
    %433 = vst [vmem:[#allocation2] sm:$0x1] %v432
    // Predicated region
    $region46: #{tpu_custom_call.1} parent=1 // pred_check
      _
    $region47: #{tpu_custom_call.1} parent=1 // pred_check_branch
      %435 = sbr.rel (0) target = $region49
    $region48: #{tpu_custom_call.1} parent=1 // pred_region
      %s437 = ssub.s32 16, 16
      %438 = vsyncadd [#allocation3], %s437
      %s440 = sshll.u32 [#allocation2], 4
      %s441 = int_to_ptr.vmem [resolvable:$true] %s440
      %443 = dma.vmem_to_hbm [thread:$0]  %s441, 16, %s11, [#allocation3]
    $region49: #{tpu_custom_call.1} parent=1 // pred_fallthru
      _
    // Predicated region
    $region50: #{tpu_custom_call.1} parent=1 // pred_check
      _
    $region51: #{tpu_custom_call.1} parent=1 // pred_check_branch
      %445 = sbr.rel (0) target = $region53
    $region52: #{tpu_custom_call.1} parent=1 // pred_region
      %446 = dma.done [#allocation3], 16
    $region53: #{tpu_custom_call.1} parent=1 // pred_fallthru
      _
    %447 = vsyncpa [#allocation3], 1

</llo_original>
